<compile_context>
chip_gen: v7x
topology: tpu7x:2x2x1
jax: 0.10.0
libtpu: 0.0.40
codegen_flags: <defaults>
</compile_context>

<pallas_src>
import functools

import numpy as np
import jax
import jax.numpy as jnp
from jax import lax
from jax.experimental import pallas as pl
from jax.experimental.pallas import tpu as pltpu

# ---- model hyper-parameters (small, consistent with the module) -------------
X_DIM = 16
S_DIM = 2
Y_DIM = 2
Z_DIM = 8
Z1_ENC_DIM = 32   # hidden of encoder_z1
X_DEC_DIM = 32    # hidden of decoder_x / decoder_y
BATCH = 8

ALPHA = 1.0       # VFAELoss.alpha
LAM = 0.0         # self.lam

# ---- packed-buffer layout constants -----------------------------------------
LANE = 128

# M1 lhs ("data32") columns: [x | s | y | 1 | zeros] -> 32 lanes
DATA_K = 32
C_ONE = X_DIM + S_DIM + Y_DIM          # 20 (constant-1 column used to fold biases)

# M1 output columns:
#   0:32   encoder hidden pre-act
#   32     constant 1  (becomes M2's bias-selector column after relu)
#   33:48  zero
#   48:80  decoder_x first layer s-part + bias
#   80:112 decoder_y first layer bias
#   112    constant 1  (becomes M4's bias-selector column)
#   113:128 zero
C1A = Z1_ENC_DIM                       # 32
H1E_W = 48                             # width of M2's lhs (hidden | 1 | zeros)
DEC1_OFF = 48                          # start of the dec1_add region
C1B = DEC1_OFF + 2 * X_DEC_DIM         # 112

# weight-slab rows (bf16; every block start/size is a multiple of 16)
R_WA = 0                               # (32,128)  fused [enc W1+b1 | 1 | dec1 s-part+biases | 1]
WA_ROWS = DATA_K                       # 32
R_WB = R_WA + WA_ROWS                  # 32: (48,128) [W_logvar | W_mu] + bias row + zero pad
WB_ROWS = 48
R_WC = R_WB + WB_ROWS                  # 80: (16,128) [W_dx1_z | W_dy1] + zero pad
WC_ROWS = 16
R_WD = R_WC + WC_ROWS                  # 96: (80,128) blockdiag(W_dx2, W_dy2) + bias row + zero pad
WD_ROWS = 80
W_ROWS = R_WD + WD_ROWS                # 176  (multiple of 16 -> clean bf16 tiling)


# ------------------------------ kernel ---------------------------------------
def icvae_kernel(in_ref, eps_ref, w_ref, out_ref, *, batch, z_dim):
    f32 = jnp.float32
    bf16 = jnp.bfloat16

    inputs = in_ref[...]                                   # (B, 20) f32
    eps = eps_ref[...]                                     # (B, 8)  f32
    x = inputs[:, 0:X_DIM]
    y = inputs[:, X_DIM + S_DIM:X_DIM + S_DIM + Y_DIM]

    # ---- build M1 lhs in-registers: [x | s | y | 1 | zeros] -> (B, 32) bf16
    data = jnp.concatenate(
        [inputs,
         jnp.ones((batch, 1), f32),
         jnp.zeros((batch, DATA_K - C_ONE - 1), f32)], axis=1).astype(bf16)

    # static, 16-row-aligned bf16 views into the single packed weight slab
    w_a = w_ref[R_WA:R_WA + WA_ROWS, :]                    # (32, 128)
    w_b = w_ref[R_WB:R_WB + WB_ROWS, :]                    # (48, 128)
    w_c = w_ref[R_WC:R_WC + WC_ROWS, :]                    # (16, 128)
    w_d = w_ref[R_WD:R_WD + WD_ROWS, :]                    # (80, 128)

    # ---- M1: encoder hidden pre-act, decoder first-layer s-branch + all first-
    #      layer biases, and two constant-1 columns (bias selectors for M2/M4).
    m1 = jnp.dot(data, w_a, preferred_element_type=f32)    # (B, 128) f32
    h1e = jnp.maximum(m1[:, 0:H1E_W], 0.0)                 # (B, 48): [hidden | 1 | 0]
    dec1_add = m1[:, DEC1_OFF:DEC1_OFF + WD_ROWS]          # (B, 80): [s@Wdx1_s+bdx1 | bdy1 | 1 | 0]

    # ---- M2: [logvar | mu] (biases folded via h1e's constant-1 column)
    m2 = jnp.dot(h1e.astype(bf16), w_b, preferred_element_type=f32)
    z1_logvar = m2[:, 0:z_dim]
    z1_mu = m2[:, z_dim:2 * z_dim]

    # single exp reused by sigma, the KL term and sigma_sq (EUP dedup)
    e = jnp.exp(z1_logvar)
    z1 = jnp.sqrt(e) * eps + z1_mu                         # reparameterization trick

    # ---- M3: [hx_z | hy_z]; lhs padded to 16 lanes for an aligned bf16 K
    z1_ext = jnp.concatenate(
        [z1, jnp.zeros((batch, WC_ROWS - z_dim), f32)], axis=1).astype(bf16)   # (B, 16)
    m3 = jnp.dot(z1_ext, w_c, preferred_element_type=f32)
    h_dec = jnp.maximum(m3[:, 0:WD_ROWS] + dec1_add, 0.0)  # (B, 80): [hx | hy | 1 | 0]

    # ---- M4: [x_logits | y_logits] (second-layer biases folded via col 64 == 1)
    m4 = jnp.dot(h_dec.astype(bf16), w_d, preferred_element_type=f32)
    x_logits = m4[:, 0:X_DIM]
    y_logits = m4[:, X_DIM:X_DIM + Y_DIM]
    y_decoded = jax.nn.sigmoid(y_logits)                   # returned output

    # ---------------- VFAELoss -------------------------------------------------
    # reconstruction BCE on logits (stable softplus form; sigmoid on x dropped)
    recons_elem = (jnp.maximum(x_logits, 0.0) - x_logits * x
                   + jnp.log(1.0 + jnp.exp(-jnp.abs(x_logits))))
    recons_loss = jnp.sum(recons_elem)                     # reduction='sum'

    # supervised BCE: one log-sigmoid, log(1-p) = log(p) - logit; clamp like torch
    logp_u = jnp.minimum(y_logits, 0.0) - jnp.log(1.0 + jnp.exp(-jnp.abs(y_logits)))
    logp = jnp.maximum(logp_u, -100.0)
    log1mp = jnp.maximum(logp_u - y_logits, -100.0)
    supervised_loss = jnp.mean(-(y * logp + (1.0 - y) * log1mp))   # BCELoss (mean)

    mu_sq = z1_mu * z1_mu
    kl_loss_z1 = 0.5 * jnp.sum(-z1_logvar - 1.0 + e + mu_sq)
    vae_loss = 0.1 * (recons_loss + kl_loss_z1) / batch + ALPHA * supervised_loss

    # ---------------- kl_conditional_and_marg (all-pairs gaussian KL) ----------
    # Single fused matmul:  0.5 * L @ R^T  reproduces
    #   first_term + r - 2*q + (mu^2/ss - log ss) row-broadcast + log ss col-broadcast
    sigma_sq = e + 1e-8
    ssi = 1.0 / sigma_sq
    log_ss = jnp.log(sigma_sq)
    musi = z1_mu * ssi
    ones_z = jnp.ones((batch, z_dim), f32)
    lmat = jnp.concatenate([sigma_sq + mu_sq, z1_mu, ones_z, log_ss], axis=1)      # (B, 4z)
    rmat = jnp.concatenate([ssi, -2.0 * musi, z1_mu * musi - log_ss, ones_z], axis=1)
    dn = (((1,), (1,)), ((), ()))                 # L @ R.T without explicit transpose
    all_pairs_gkl = 0.5 * lax.dot_general(lmat, rmat, dn,
                                          preferred_element_type=f32) - 0.5 * z_dim
    mi_sz = jnp.mean(all_pairs_gkl, axis=1, keepdims=True) + 0.1 * (recons_loss / batch)
    vae_loss = vae_loss + LAM * jnp.mean(mi_sz)

    # ---------------- single full-width lane-dense store -----------------------
    out_ref[...] = jnp.concatenate(
        [jnp.full((batch, 1), vae_loss, f32),              # col 0: loss (broadcast)
         mi_sz.astype(f32),                                # col 1: mi_sz
         y_decoded.astype(f32),                            # cols 2:4: y_prob
         jnp.zeros((batch, LANE - 2 - Y_DIM), f32)], axis=1)


# ------------------------------ packing helpers ------------------------------
def pack_weight_slab(params):
    """All 14 weight/bias tensors -> one (176, 128) bf16 slab (pack once, reuse)."""
    (w1, b1, wlv, blv, wmu, bmu,
     wdx1, bdx1, wdx2, bdx2, wdy1, bdy1, wdy2, bdy2) = params
    slab = jnp.zeros((W_ROWS, LANE), jnp.float32)
    # W_A: rows indexed by data32 columns
    slab = slab.at[0:X_DIM + S_DIM, 0:Z1_ENC_DIM].set(w1)                   # encoder W1 (x‖s)
    slab = slab.at[C_ONE, 0:Z1_ENC_DIM].set(b1)                             # encoder bias
    slab = slab.at[C_ONE, C1A].set(1.0)                                     # const-1 -> M2 bias col
    slab = slab.at[X_DIM:X_DIM + S_DIM,
                   DEC1_OFF:DEC1_OFF + X_DEC_DIM].set(wdx1[Z_DIM:])         # decoder_x s-part
    slab = slab.at[C_ONE, DEC1_OFF:DEC1_OFF + X_DEC_DIM].set(bdx1)          # decoder_x bias1
    slab = slab.at[C_ONE, DEC1_OFF + X_DEC_DIM:C1B].set(bdy1)               # decoder_y bias1
    slab = slab.at[C_ONE, C1B].set(1.0)                                     # const-1 -> M4 bias col
    # W_B = [W_logvar | W_mu] with a fused bias row
    slab = slab.at[R_WB:R_WB + Z1_ENC_DIM, 0:Z_DIM].set(wlv)
    slab = slab.at[R_WB:R_WB + Z1_ENC_DIM, Z_DIM:2 * Z_DIM].set(wmu)
    slab = slab.at[R_WB + Z1_ENC_DIM, 0:Z_DIM].set(blv)
    slab = slab.at[R_WB + Z1_ENC_DIM, Z_DIM:2 * Z_DIM].set(bmu)
    # W_C = [W_dx1_z | W_dy1]
    slab = slab.at[R_WC:R_WC + Z_DIM, 0:X_DEC_DIM].set(wdx1[:Z_DIM])
    slab = slab.at[R_WC:R_WC + Z_DIM, X_DEC_DIM:2 * X_DEC_DIM].set(wdy1)
    # W_D = blockdiag(W_dx2, W_dy2) with a fused bias row
    slab = slab.at[R_WD:R_WD + X_DEC_DIM, 0:X_DIM].set(wdx2)
    slab = slab.at[R_WD + X_DEC_DIM:R_WD + 2 * X_DEC_DIM,
                   X_DIM:X_DIM + Y_DIM].set(wdy2)
    slab = slab.at[R_WD + 2 * X_DEC_DIM, 0:X_DIM].set(bdx2)
    slab = slab.at[R_WD + 2 * X_DEC_DIM, X_DIM:X_DIM + Y_DIM].set(bdy2)
    return slab.astype(jnp.bfloat16)


# ------------------------------ wrapper --------------------------------------
def icvae_forward(inputs, eps, weight_slab):
    """inputs: [B, x_dim + s_dim + y_dim]; returns (vae_loss, mi_sz, y_prob)."""
    batch = inputs.shape[0]
    vmem = pl.BlockSpec(memory_space=pltpu.MemorySpace.VMEM)
    out = pl.pallas_call(
        functools.partial(icvae_kernel, batch=batch, z_dim=Z_DIM),
        out_shape=jax.ShapeDtypeStruct((batch, LANE), jnp.float32),
        in_specs=[vmem, vmem, vmem],
        out_specs=vmem,
    )(inputs, eps, weight_slab)
    vae_loss = out[0, 0]
    mi_sz = out[:, 1]
    y_prob = jnp.squeeze(out[:, 2:2 + Y_DIM])
    return vae_loss, mi_sz, y_prob


# ---------------------- deterministic parameter init -------------------------
def _linear(key, fan_in, fan_out):
    k_w, k_b = jax.random.split(key)
    bound = 1.0 / np.sqrt(fan_in)
    w = jax.random.uniform(k_w, (fan_in, fan_out), jnp.float32, -bound, bound)
    b = jax.random.uniform(k_b, (fan_out,), jnp.float32, -bound, bound)
    return w, b


def init_params(key):
    keys = jax.random.split(key, 7)
    w1, b1 = _linear(keys[0], X_DIM + S_DIM, Z1_ENC_DIM)      # encoder_z1 lin1
    wlv, blv = _linear(keys[1], Z1_ENC_DIM, Z_DIM)            # logvar head
    wmu, bmu = _linear(keys[2], Z1_ENC_DIM, Z_DIM)            # mu head
    wdx1, bdx1 = _linear(keys[3], Z_DIM + S_DIM, X_DEC_DIM)   # decoder_x lin1
    wdx2, bdx2 = _linear(keys[4], X_DEC_DIM, X_DIM)           # decoder_x lin2
    wdy1, bdy1 = _linear(keys[5], Z_DIM, X_DEC_DIM)           # decoder_y lin1
    wdy2, bdy2 = _linear(keys[6], X_DEC_DIM, Y_DIM)           # decoder_y lin2
    return (w1, b1, wlv, blv, wmu, bmu,
            wdx1, bdx1, wdx2, bdx2, wdy1, bdy1, wdy2, bdy2)


# ---------------------- pure-JAX reference (torch-faithful, f32) -------------
def reference_forward(inputs, params, eps):
    (w1, b1, wlv, blv, wmu, bmu,
     wdx1, bdx1, wdx2, bdx2, wdy1, bdy1, wdy2, bdy2) = params
    x = inputs[:, :X_DIM]
    s = inputs[:, X_DIM:X_DIM + S_DIM]
    y = inputs[:, -Y_DIM:]
    batch = x.shape[0]

    xs = jnp.concatenate([x, s], axis=1)
    h1 = jnp.maximum(xs @ w1 + b1, 0.0)
    logvar = h1 @ wlv + blv
    mu = h1 @ wmu + bmu
    z1 = jnp.sqrt(jnp.exp(logvar)) * eps + mu

    z1s = jnp.concatenate([z1, s], axis=1)
    hx = jnp.maximum(z1s @ wdx1 + bdx1, 0.0)
    x_dec = jax.nn.sigmoid(hx @ wdx2 + bdx2)
    hy = jnp.maximum(z1 @ wdy1 + bdy1, 0.0)
    y_dec = jax.nn.sigmoid(hy @ wdy2 + bdy2)

    def bce(p, t):  # torch BCELoss element-wise, log clamped at -100
        return -(t * jnp.maximum(jnp.log(p), -100.0)
                 + (1.0 - t) * jnp.maximum(jnp.log(1.0 - p), -100.0))

    supervised = jnp.mean(bce(y_dec, y))
    recons = jnp.sum(bce(x_dec, x))
    kl = 0.5 * jnp.sum(-logvar - 1.0 + jnp.exp(logvar) + mu * mu)
    vae_loss = 0.1 * (recons + kl) / batch + ALPHA * supervised

    z_sigma = jnp.exp(0.5 * logvar)
    ss = z_sigma ** 2 + 1e-8
    ssi = 1.0 / ss
    first = ss @ ssi.T
    r = (mu * mu) @ ssi.T
    r2 = jnp.sum(mu * mu * ssi, axis=1)
    second = r - 2.0 * (mu @ (mu * ssi).T) + r2[None, :]
    r3 = jnp.sum(jnp.log(ss), axis=1, keepdims=True)
    third = r3 - r3.T
    apgkl = 0.5 * (first + second + third) - 0.5 * Z_DIM
    mi_sz = jnp.mean(apgkl, axis=1) + 0.1 * (recons / batch)
    vae_loss = vae_loss + LAM * jnp.mean(mi_sz)
    return vae_loss, mi_sz, jnp.squeeze(y_dec)


if __name__ == "__main__":
    key = jax.random.PRNGKey(0)
    k_x, k_s, k_y, k_eps, k_p = jax.random.split(key, 5)

    x = jax.random.uniform(k_x, (BATCH, X_DIM), jnp.float32)                 # BCE target in [0,1]
    s = (jax.random.uniform(k_s, (BATCH, S_DIM)) > 0.5).astype(jnp.float32)  # sensitive attr
    y = (jax.random.uniform(k_y, (BATCH, Y_DIM)) > 0.5).astype(jnp.float32)  # labels
    inputs = jnp.concatenate([x, s, y], axis=1)                              # [B, 20]
    eps = jax.random.normal(k_eps, (BATCH, Z_DIM), jnp.float32)              # reparam noise
    params = init_params(k_p)

    weight_slab = pack_weight_slab(params)   # packed once (bf16), reused across calls

    fwd = jax.jit(icvae_forward)
    vae_loss, mi_sz, y_prob = jax.block_until_ready(fwd(inputs, eps, weight_slab))

    ref_loss, ref_mi, ref_yp = reference_forward(inputs, params, eps)
    # bf16 matmul operands (f32 accumulation) vs. the f32 reference: 2e-2 tolerance.
    np.testing.assert_allclose(np.asarray(vae_loss), np.asarray(ref_loss), rtol=2e-2, atol=2e-2)
    np.testing.assert_allclose(np.asarray(mi_sz), np.asarray(ref_mi), rtol=2e-2, atol=2e-2)
    np.testing.assert_allclose(np.asarray(y_prob), np.asarray(ref_yp), rtol=2e-2, atol=2e-2)

    print("KERNEL_OK")
</pallas_src>

<mosaic_0001>
module attributes {stable_mosaic.version = 11 : i64} {
  func.func @icvae_kernel(%arg0: memref<8x20xf32, #tpu.memory_space<vmem>>, %arg1: memref<8x8xf32, #tpu.memory_space<vmem>>, %arg2: memref<176x128xbf16, #tpu.memory_space<vmem>>, %arg3: memref<8x128xf32, #tpu.memory_space<vmem>>) attributes {dimension_semantics = [], scalar_prefetch = 0 : i64, scratch_operands = 0 : i64, tpu.core_type = #tpu.core_type<tc>} {
    %c0 = arith.constant 0 : index
    %c0_0 = arith.constant 0 : index
    %0 = vector.load %arg0[%c0, %c0_0] : memref<8x20xf32, #tpu.memory_space<vmem>>, vector<8x20xf32>
    %c0_1 = arith.constant 0 : index
    %c0_2 = arith.constant 0 : index
    %1 = vector.load %arg1[%c0_1, %c0_2] : memref<8x8xf32, #tpu.memory_space<vmem>>, vector<8x8xf32>
    %2 = vector.extract_strided_slice %0 {offsets = [0, 0], sizes = [8, 16], strides = [1, 1]} : vector<8x20xf32> to vector<8x16xf32>
    %3 = vector.extract_strided_slice %0 {offsets = [0, 18], sizes = [8, 2], strides = [1, 1]} : vector<8x20xf32> to vector<8x2xf32>
    %cst = arith.constant 1.000000e+00 : f32
    %4 = vector.broadcast %cst : f32 to vector<8x1xf32>
    %cst_3 = arith.constant 0.000000e+00 : f32
    %5 = vector.broadcast %cst_3 : f32 to vector<8x11xf32>
    %6 = tpu.concatenate %0, %4, %5 in 1 : vector<8x20xf32>, vector<8x1xf32>, vector<8x11xf32> -> vector<8x32xf32>
    %7 = arith.truncf %6 : vector<8x32xf32> to vector<8x32xbf16>
    %c0_4 = arith.constant 0 : index
    %c0_5 = arith.constant 0 : index
    %8 = vector.load %arg2[%c0_4, %c0_5] : memref<176x128xbf16, #tpu.memory_space<vmem>>, vector<32x128xbf16>
    %c32 = arith.constant 32 : index
    %c0_6 = arith.constant 0 : index
    %9 = vector.load %arg2[%c32, %c0_6] : memref<176x128xbf16, #tpu.memory_space<vmem>>, vector<48x128xbf16>
    %c80 = arith.constant 80 : index
    %c0_7 = arith.constant 0 : index
    %10 = vector.load %arg2[%c80, %c0_7] : memref<176x128xbf16, #tpu.memory_space<vmem>>, vector<16x128xbf16>
    %c96 = arith.constant 96 : index
    %c0_8 = arith.constant 0 : index
    %11 = vector.load %arg2[%c96, %c0_8] : memref<176x128xbf16, #tpu.memory_space<vmem>>, vector<80x128xbf16>
    %cst_9 = arith.constant dense<0.000000e+00> : vector<8x128xf32>
    %12 = tpu.matmul %7, %8, %cst_9 {dimension_numbers = #tpu.dot_dimension_numbers<[1], [0], [0], [1], [0, 0, 1, 1], [], []>} : vector<8x32xbf16>, vector<32x128xbf16>, vector<8x128xf32> -> vector<8x128xf32>
    %13 = vector.extract_strided_slice %12 {offsets = [0, 0], sizes = [8, 48], strides = [1, 1]} : vector<8x128xf32> to vector<8x48xf32>
    %cst_10 = arith.constant 0.000000e+00 : f32
    %14 = vector.broadcast %cst_10 : f32 to vector<8x48xf32>
    %15 = arith.maximumf %13, %14 : vector<8x48xf32>
    %16 = vector.extract_strided_slice %12 {offsets = [0, 48], sizes = [8, 80], strides = [1, 1]} : vector<8x128xf32> to vector<8x80xf32>
    %17 = arith.truncf %15 : vector<8x48xf32> to vector<8x48xbf16>
    %cst_11 = arith.constant dense<0.000000e+00> : vector<8x128xf32>
    %18 = tpu.matmul %17, %9, %cst_11 {dimension_numbers = #tpu.dot_dimension_numbers<[1], [0], [0], [1], [0, 0, 1, 1], [], []>} : vector<8x48xbf16>, vector<48x128xbf16>, vector<8x128xf32> -> vector<8x128xf32>
    %19 = vector.extract_strided_slice %18 {offsets = [0, 0], sizes = [8, 8], strides = [1, 1]} : vector<8x128xf32> to vector<8x8xf32>
    %20 = vector.extract_strided_slice %18 {offsets = [0, 8], sizes = [8, 8], strides = [1, 1]} : vector<8x128xf32> to vector<8x8xf32>
    %21 = math.exp %19 : vector<8x8xf32>
    %22 = math.sqrt %21 : vector<8x8xf32>
    %23 = arith.mulf %22, %1 : vector<8x8xf32>
    %24 = arith.addf %23, %20 : vector<8x8xf32>
    %cst_12 = arith.constant 0.000000e+00 : f32
    %25 = vector.broadcast %cst_12 : f32 to vector<8x8xf32>
    %26 = tpu.concatenate %24, %25 in 1 : vector<8x8xf32>, vector<8x8xf32> -> vector<8x16xf32>
    %27 = arith.truncf %26 : vector<8x16xf32> to vector<8x16xbf16>
    %cst_13 = arith.constant dense<0.000000e+00> : vector<8x128xf32>
    %28 = tpu.matmul %27, %10, %cst_13 {dimension_numbers = #tpu.dot_dimension_numbers<[1], [0], [0], [1], [0, 0, 1, 1], [], []>} : vector<8x16xbf16>, vector<16x128xbf16>, vector<8x128xf32> -> vector<8x128xf32>
    %29 = vector.extract_strided_slice %28 {offsets = [0, 0], sizes = [8, 80], strides = [1, 1]} : vector<8x128xf32> to vector<8x80xf32>
    %30 = arith.addf %29, %16 : vector<8x80xf32>
    %cst_14 = arith.constant 0.000000e+00 : f32
    %31 = vector.broadcast %cst_14 : f32 to vector<8x80xf32>
    %32 = arith.maximumf %30, %31 : vector<8x80xf32>
    %33 = arith.truncf %32 : vector<8x80xf32> to vector<8x80xbf16>
    %cst_15 = arith.constant dense<0.000000e+00> : vector<8x128xf32>
    %34 = tpu.matmul %33, %11, %cst_15 {dimension_numbers = #tpu.dot_dimension_numbers<[1], [0], [0], [1], [0, 0, 1, 1], [], []>} : vector<8x80xbf16>, vector<80x128xbf16>, vector<8x128xf32> -> vector<8x128xf32>
    %35 = vector.extract_strided_slice %34 {offsets = [0, 0], sizes = [8, 16], strides = [1, 1]} : vector<8x128xf32> to vector<8x16xf32>
    %36 = vector.extract_strided_slice %34 {offsets = [0, 16], sizes = [8, 2], strides = [1, 1]} : vector<8x128xf32> to vector<8x2xf32>
    %37 = arith.negf %36 : vector<8x2xf32>
    %38 = math.exp %37 : vector<8x2xf32>
    %cst_16 = arith.constant 1.000000e+00 : f32
    %39 = vector.broadcast %cst_16 : f32 to vector<8x2xf32>
    %40 = arith.addf %39, %38 : vector<8x2xf32>
    %41 = arith.divf %39, %40 : vector<8x2xf32>
    %cst_17 = arith.constant 0.000000e+00 : f32
    %42 = vector.broadcast %cst_17 : f32 to vector<8x16xf32>
    %43 = arith.maximumf %35, %42 : vector<8x16xf32>
    %44 = arith.mulf %35, %2 : vector<8x16xf32>
    %45 = arith.subf %43, %44 : vector<8x16xf32>
    %46 = math.absf %35 : vector<8x16xf32>
    %cst_18 = arith.constant 0.000000e+00 : f32
    %47 = vector.broadcast %cst_18 : f32 to vector<8x16xf32>
    %48 = arith.subf %47, %46 : vector<8x16xf32>
    %49 = math.exp %48 : vector<8x16xf32>
    %cst_19 = arith.constant 1.000000e+00 : f32
    %50 = vector.broadcast %cst_19 : f32 to vector<8x16xf32>
    %51 = arith.addf %50, %49 : vector<8x16xf32>
    %52 = math.log %51 : vector<8x16xf32>
    %53 = arith.addf %45, %52 : vector<8x16xf32>
    %54 = vector.shape_cast %53 : vector<8x16xf32> to vector<1x8x16xf32>
    %cst_20 = arith.constant dense<0.000000e+00> : vector<1xf32>
    %55 = vector.multi_reduction <add>, %54, %cst_20 [1, 2] : vector<1x8x16xf32> to vector<1xf32>
    %56 = vector.shape_cast %55 : vector<1xf32> to vector<1x1x1xf32>
    %57 = vector.extract %56[0, 0, 0] : f32 from vector<1x1x1xf32>
    %cst_21 = arith.constant 0.000000e+00 : f32
    %58 = vector.broadcast %cst_21 : f32 to vector<8x2xf32>
    %59 = arith.minimumf %36, %58 : vector<8x2xf32>
    %60 = math.absf %36 : vector<8x2xf32>
    %cst_22 = arith.constant 0.000000e+00 : f32
    %61 = vector.broadcast %cst_22 : f32 to vector<8x2xf32>
    %62 = arith.subf %61, %60 : vector<8x2xf32>
    %63 = math.exp %62 : vector<8x2xf32>
    %cst_23 = arith.constant 1.000000e+00 : f32
    %64 = vector.broadcast %cst_23 : f32 to vector<8x2xf32>
    %65 = arith.addf %64, %63 : vector<8x2xf32>
    %66 = math.log %65 : vector<8x2xf32>
    %67 = arith.subf %59, %66 : vector<8x2xf32>
    %cst_24 = arith.constant -1.000000e+02 : f32
    %68 = vector.broadcast %cst_24 : f32 to vector<8x2xf32>
    %69 = arith.maximumf %67, %68 : vector<8x2xf32>
    %70 = arith.subf %67, %36 : vector<8x2xf32>
    %cst_25 = arith.constant -1.000000e+02 : f32
    %71 = vector.broadcast %cst_25 : f32 to vector<8x2xf32>
    %72 = arith.maximumf %70, %71 : vector<8x2xf32>
    %73 = arith.mulf %3, %69 : vector<8x2xf32>
    %cst_26 = arith.constant 1.000000e+00 : f32
    %74 = vector.broadcast %cst_26 : f32 to vector<8x2xf32>
    %75 = arith.subf %74, %3 : vector<8x2xf32>
    %76 = arith.mulf %75, %72 : vector<8x2xf32>
    %77 = arith.addf %73, %76 : vector<8x2xf32>
    %cst_27 = arith.constant 0.000000e+00 : f32
    %78 = vector.broadcast %cst_27 : f32 to vector<8x2xf32>
    %79 = arith.subf %78, %77 : vector<8x2xf32>
    %80 = vector.shape_cast %79 : vector<8x2xf32> to vector<1x8x2xf32>
    %cst_28 = arith.constant dense<0.000000e+00> : vector<1xf32>
    %81 = vector.multi_reduction <add>, %80, %cst_28 [1, 2] : vector<1x8x2xf32> to vector<1xf32>
    %82 = vector.shape_cast %81 : vector<1xf32> to vector<1x1x1xf32>
    %83 = vector.extract %82[0, 0, 0] : f32 from vector<1x1x1xf32>
    %cst_29 = arith.constant 1.600000e+01 : f32
    %84 = arith.divf %83, %cst_29 : f32
    %85 = arith.mulf %20, %20 : vector<8x8xf32>
    %cst_30 = arith.constant 0.000000e+00 : f32
    %86 = vector.broadcast %cst_30 : f32 to vector<8x8xf32>
    %87 = arith.subf %86, %19 : vector<8x8xf32>
    %cst_31 = arith.constant 1.000000e+00 : f32
    %88 = vector.broadcast %cst_31 : f32 to vector<8x8xf32>
    %89 = arith.subf %87, %88 : vector<8x8xf32>
    %90 = arith.addf %89, %21 : vector<8x8xf32>
    %91 = arith.addf %90, %85 : vector<8x8xf32>
    %92 = vector.shape_cast %91 : vector<8x8xf32> to vector<1x8x8xf32>
    %cst_32 = arith.constant dense<0.000000e+00> : vector<1xf32>
    %93 = vector.multi_reduction <add>, %92, %cst_32 [1, 2] : vector<1x8x8xf32> to vector<1xf32>
    %94 = vector.shape_cast %93 : vector<1xf32> to vector<1x1x1xf32>
    %95 = vector.extract %94[0, 0, 0] : f32 from vector<1x1x1xf32>
    %cst_33 = arith.constant 5.000000e-01 : f32
    %96 = arith.mulf %cst_33, %95 : f32
    %97 = arith.addf %57, %96 : f32
    %cst_34 = arith.constant 1.000000e-01 : f32
    %98 = arith.mulf %cst_34, %97 : f32
    %cst_35 = arith.constant 8.000000e+00 : f32
    %99 = arith.divf %98, %cst_35 : f32
    %cst_36 = arith.constant 1.000000e+00 : f32
    %100 = arith.mulf %cst_36, %84 : f32
    %101 = arith.addf %99, %100 : f32
    %cst_37 = arith.constant 9.99999993E-9 : f32
    %102 = vector.broadcast %cst_37 : f32 to vector<8x8xf32>
    %103 = arith.addf %21, %102 : vector<8x8xf32>
    %cst_38 = arith.constant 1.000000e+00 : f32
    %104 = vector.broadcast %cst_38 : f32 to vector<8x8xf32>
    %105 = arith.divf %104, %103 : vector<8x8xf32>
    %106 = math.log %103 : vector<8x8xf32>
    %107 = arith.mulf %20, %105 : vector<8x8xf32>
    %cst_39 = arith.constant 1.000000e+00 : f32
    %108 = vector.broadcast %cst_39 : f32 to vector<8x8xf32>
    %109 = arith.addf %103, %85 : vector<8x8xf32>
    %110 = tpu.concatenate %109, %20, %108, %106 in 1 : vector<8x8xf32>, vector<8x8xf32>, vector<8x8xf32>, vector<8x8xf32> -> vector<8x32xf32>
    %cst_40 = arith.constant -2.000000e+00 : f32
    %111 = vector.broadcast %cst_40 : f32 to vector<8x8xf32>
    %112 = arith.mulf %111, %107 : vector<8x8xf32>
    %113 = arith.mulf %20, %107 : vector<8x8xf32>
    %114 = arith.subf %113, %106 : vector<8x8xf32>
    %115 = tpu.concatenate %105, %112, %114, %108 in 1 : vector<8x8xf32>, vector<8x8xf32>, vector<8x8xf32>, vector<8x8xf32> -> vector<8x32xf32>
    %cst_41 = arith.constant dense<0.000000e+00> : vector<8x8xf32>
    %116 = tpu.matmul %110, %115, %cst_41 {dimension_numbers = #tpu.dot_dimension_numbers<[1], [1], [0], [0], [0, 0, 1, 0], [], []>} : vector<8x32xf32>, vector<8x32xf32>, vector<8x8xf32> -> vector<8x8xf32>
    %cst_42 = arith.constant 5.000000e-01 : f32
    %117 = vector.broadcast %cst_42 : f32 to vector<8x8xf32>
    %118 = arith.mulf %117, %116 : vector<8x8xf32>
    %cst_43 = arith.constant 4.000000e+00 : f32
    %119 = vector.broadcast %cst_43 : f32 to vector<8x8xf32>
    %120 = arith.subf %118, %119 : vector<8x8xf32>
    %cst_44 = arith.constant dense<0.000000e+00> : vector<8xf32>
    %121 = vector.multi_reduction <add>, %120, %cst_44 [1] : vector<8x8xf32> to vector<8xf32>
    %122 = vector.shape_cast %121 : vector<8xf32> to vector<8x1xf32>
    %cst_45 = arith.constant 8.000000e+00 : f32
    %123 = vector.broadcast %cst_45 : f32 to vector<8x1xf32>
    %124 = arith.divf %122, %123 : vector<8x1xf32>
    %cst_46 = arith.constant 8.000000e+00 : f32
    %125 = arith.divf %57, %cst_46 : f32
    %cst_47 = arith.constant 1.000000e-01 : f32
    %126 = arith.mulf %cst_47, %125 : f32
    %127 = vector.broadcast %126 : f32 to vector<8x1xf32>
    %128 = arith.addf %124, %127 : vector<8x1xf32>
    %129 = vector.shape_cast %128 : vector<8x1xf32> to vector<1x8x1xf32>
    %cst_48 = arith.constant dense<0.000000e+00> : vector<1xf32>
    %130 = vector.multi_reduction <add>, %129, %cst_48 [1, 2] : vector<1x8x1xf32> to vector<1xf32>
    %131 = vector.shape_cast %130 : vector<1xf32> to vector<1x1x1xf32>
    %132 = vector.extract %131[0, 0, 0] : f32 from vector<1x1x1xf32>
    %cst_49 = arith.constant 8.000000e+00 : f32
    %133 = arith.divf %132, %cst_49 : f32
    %cst_50 = arith.constant 0.000000e+00 : f32
    %134 = arith.mulf %cst_50, %133 : f32
    %135 = arith.addf %101, %134 : f32
    %136 = vector.broadcast %135 : f32 to vector<8x1xf32>
    %cst_51 = arith.constant 0.000000e+00 : f32
    %137 = vector.broadcast %cst_51 : f32 to vector<8x124xf32>
    %138 = tpu.concatenate %136, %128, %41, %137 in 1 : vector<8x1xf32>, vector<8x1xf32>, vector<8x2xf32>, vector<8x124xf32> -> vector<8x128xf32>
    %c0_52 = arith.constant 0 : index
    %c0_53 = arith.constant 0 : index
    %139 = vector.load %arg3[%c0_52, %c0_53] : memref<8x128xf32, #tpu.memory_space<vmem>>, vector<8x128xf32>
    tpu.vector_store %arg3[%c0_52, %c0_53], %138 {strides = array<i32>} : memref<8x128xf32, #tpu.memory_space<vmem>>, vector<8x128xf32>,
    return
  }
}

</mosaic_0001>

<llo_original>
// kernel: icvae_forward.1
$region0: #{icvae_forward.1}
  #allocation0 [shape = 'u32[]', space=smem, size = 0x4, offset = 0x4, fixed_abs, tag = 'smem constant byte address 0x4 - core index']
  #allocation1 [shape = 'u32[144,128]{1,0:T(1,128)}', space=vmem, size = 0x12000, scoped, tag = 'internal scratch']
  %s0 = inlined_call_operand.hbm [shape: f32[8,20], index: 0, kind: input, shape index: {}]
  %s1 = inlined_call_operand.hbm [shape: f32[8,8], index: 1, kind: input, shape index: {}]
  %s2 = inlined_call_operand.hbm [shape: bf16[176,128], index: 2, kind: input, shape index: {}]
  %s3 = inlined_call_operand.vmem [shape: f32[8,128], index: 3, kind: output, shape index: {}]
  %s4 = sld [smem:[#allocation0]]
  $region34: #{icvae_forward.1} parent=0
    _
  %s6 = ssub.s32 1, %s4
  %s7 = scalar_select 0, %s6, %s4
  $region1: #{icvae_forward.1} parent=0
    #allocation2 [shape = 'u8[4096]{0}', space=vmem, size = 0x1000, scoped, tag = 'input window, operand 0, single buffered']
    #allocation3 [shape = 's32[1]{0}', space=sflag, size = 0x4, scoped, tag = 'scoped memory for icvae_forward.1']
    #allocation4 [shape = 'u8[4096]{0}', space=vmem, size = 0x1000, scoped, tag = 'input window, operand 1, single buffered']
    #allocation5 [shape = 's32[1]{0}', space=sflag, size = 0x4, scoped, tag = 'scoped memory for icvae_forward.1']
    #allocation6 [shape = 'u8[45056]{0}', space=vmem, size = 0xb000, scoped, tag = 'input window, operand 2, single buffered']
    %8 = vsyncpa [#allocation3], 0
    %9 = vsyncpa [#allocation5], 0
    // Predicated region
    $region2: #{icvae_forward.1} parent=1 // pred_check
      _
    $region3: #{icvae_forward.1} parent=1 // pred_check_branch
      %11 = sbr.rel (0) target = $region5
    $region4: #{icvae_forward.1} parent=1 // pred_region
      %s13 = ssub.s32 128, 128
      %14 = vsyncadd [#allocation3], %s13
      %s16 = sshll.u32 [#allocation2], 4
      %s17 = int_to_ptr.vmem [resolvable:$true] %s16
      %19 = dma.hbm_to_vmem [thread:$0]  %s0, 128, %s17, [#allocation3]
    $region5: #{icvae_forward.1} parent=1 // pred_fallthru
      _
    // Predicated region
    $region6: #{icvae_forward.1} parent=1 // pred_check
      _
    $region7: #{icvae_forward.1} parent=1 // pred_check_branch
      %21 = sbr.rel (0) target = $region9
    $region8: #{icvae_forward.1} parent=1 // pred_region
      %s23 = ssub.s32 128, 128
      %24 = vsyncadd [#allocation5], %s23
      %s26 = sshll.u32 [#allocation4], 4
      %s27 = int_to_ptr.vmem [resolvable:$true] %s26
      %29 = dma.hbm_to_vmem [thread:$0]  %s1, 128, %s27, [#allocation5]
    $region9: #{icvae_forward.1} parent=1 // pred_fallthru
      _
    // Predicated region
    $region10: #{icvae_forward.1} parent=1 // pred_check
      _
    $region11: #{icvae_forward.1} parent=1 // pred_check_branch
      %31 = sbr.rel (0) target = $region13
    $region12: #{icvae_forward.1} parent=1 // pred_region
      %s33 = ssub.s32 1408, 1408
      %34 = vsyncadd [#allocation5], %s33
      %s35 = sshll.u32 [#allocation6], 4
      %s36 = int_to_ptr.vmem [resolvable:$true] %s35
      %41 = dma.hbm_to_vmem [thread:$0]  %s2, 1408, %s36, [#allocation5], 64, 64, 4
    $region13: #{icvae_forward.1} parent=1 // pred_fallthru
      _
    // Predicated region
    $region14: #{icvae_forward.1} parent=1 // pred_check
      _
    $region15: #{icvae_forward.1} parent=1 // pred_check_branch
      %43 = sbr.rel (0) target = $region17
    $region16: #{icvae_forward.1} parent=1 // pred_region
      %44 = dma.done [#allocation3], 128
    $region17: #{icvae_forward.1} parent=1 // pred_fallthru
      _
    // Predicated region
    $region18: #{icvae_forward.1} parent=1 // pred_check
      _
    $region19: #{icvae_forward.1} parent=1 // pred_check_branch
      %46 = sbr.rel (0) target = $region21
    $region20: #{icvae_forward.1} parent=1 // pred_region
      %47 = dma.done [#allocation5], 128
    $region21: #{icvae_forward.1} parent=1 // pred_fallthru
      _
    // Predicated region
    $region22: #{icvae_forward.1} parent=1 // pred_check
      _
    $region23: #{icvae_forward.1} parent=1 // pred_check_branch
      %49 = sbr.rel (0) target = $region25
    $region24: #{icvae_forward.1} parent=1 // pred_region
      %50 = dma.done [#allocation5], 1408
    $region25: #{icvae_forward.1} parent=1 // pred_fallthru
      _
    %v52 = vld [vmem:[#allocation2] sm:$0xff]
    %v53 = vld [vmem:[#allocation4] sm:$0xff]
    %vm54 = vcmask 162816
    %v55 = vsel %vm54, %v52, 1.0
    %vm56 = vcmask 171008
    %v57 = vsel %vm56, %v55, 0.0
    %v58 = vpack.c.bf16 %v57, %v57
    %v59 = vld [vmem:[#allocation6] sm:$0xf]
    %v60 = vld [vmem:[#allocation6 + $0x4] sm:$0xf]
    %v61 = vld [vmem:[#allocation6 + $0x8] sm:$0xf]
    %v62 = vld [vmem:[#allocation6 + $0xc] sm:$0xf]
    %v63 = vld [vmem:[#allocation6 + $0x10] sm:$0xf]
    %v64 = vld [vmem:[#allocation6 + $0x14] sm:$0xf]
    %v65 = vld [vmem:[#allocation6 + $0x18] sm:$0xf]
    %v66 = vld [vmem:[#allocation6 + $0x1c] sm:$0xf]
    %v67 = vld [vmem:[#allocation6 + $0x20] sm:$0xf]
    %v68 = vld [vmem:[#allocation6 + $0x24] sm:$0xf]
    %v69 = vld [vmem:[#allocation6 + $0x28] sm:$0xf]
    %v70 = vld [vmem:[#allocation6 + $0x2c] sm:$0xf]
    %v71 = vld [vmem:[#allocation6 + $0x30] sm:$0xf]
    %v72 = vld [vmem:[#allocation6 + $0x34] sm:$0xf]
    %v73 = vld [vmem:[#allocation6 + $0x38] sm:$0xf]
    %v74 = vld [vmem:[#allocation6 + $0x3c] sm:$0xf]
    %v75 = vld [vmem:[#allocation6 + $0x40] sm:$0xf]
    %v76 = vld [vmem:[#allocation6 + $0x44] sm:$0xf]
    %v77 = vld [vmem:[#allocation6 + $0x48] sm:$0xf]
    %v78 = vld [vmem:[#allocation6 + $0x4c] sm:$0xf]
    %v79 = vld [vmem:[#allocation6 + $0x50] sm:$0xf]
    %v80 = vld [vmem:[#allocation6 + $0x54] sm:$0xf]
    %v85 = vunpack.c.l.b16 %v59
    %v86 = vunpack.c.l.b16 %v60
    %v87 = vunpack.c.l.b16 %v61
    %v88 = vunpack.c.l.b16 %v62
    %v89 = vpack.c.b16 %v86, %v85
    %v90 = vpack.c.b16 %v88, %v87
    %vm93 = vcmask 261120
    %v95 = vsel %vm93, %v58, 0
    %97 = vmatprep.subr.bf16.mxu0 0
    %98 = vmatpush1.bf16.msra.mxu0 %v89
    %99 = vmatprep.subr.bf16.mxu0 0
    %100 = vmatpush1.bf16.msra.mxu0 %v90
    %101 = vmatprep.subr.bf16.mxu0 0
    %102 = vmatpush1.bf16.msra.mxu0 0
    %103 = vmatprep.subr.bf16.mxu0 0
    %104 = vmatpush1.bf16.msra.mxu0 0
    %105 = vmatprep.subr.bf16.mxu0 0
    %106 = vmatpush1.bf16.msra.mxu0 0
    %107 = vmatprep.subr.bf16.mxu0 0
    %108 = vmatpush1.bf16.msra.mxu0 0
    %109 = vmatprep.subr.bf16.mxu0 0
    %110 = vmatpush1.bf16.msra.mxu0 0
    %111 = vmatprep.subr.bf16.mxu0 0
    %112 = vmatpush1.bf16.msra.mxu0 0
    %113 = vmatprep.subr.bf16.mxu0 0
    %114 = vmatpush1.bf16.msra.mxu0 0
    %115 = vmatprep.subr.bf16.mxu0 0
    %116 = vmatpush1.bf16.msra.mxu0 0
    %117 = vmatprep.subr.bf16.mxu0 0
    %118 = vmatpush1.bf16.msra.mxu0 0
    %119 = vmatprep.subr.bf16.mxu0 0
    %120 = vmatpush1.bf16.msra.mxu0 0
    %121 = vmatprep.subr.bf16.mxu0 0
    %122 = vmatpush1.bf16.msra.mxu0 0
    %123 = vmatprep.subr.bf16.mxu0 0
    %124 = vmatpush1.bf16.msra.mxu0 0
    %125 = vmatprep.subr.bf16.mxu0 0
    %126 = vmatpush1.bf16.msra.mxu0 0
    %127 = vmatprep.subr.bf16.mxu0 0
    %128 = vmatpush1.bf16.msra.mxu0 0
    %129 = vmatprep.mubr.bf16.mxu0 0
    %130 = vmatmul.mubr.bf16.gmra.mrb[0].mxu0 %v95
    %v131 = vpop.f32.mrb[0].mxu0
    %v132 = vadd.f32 0.0, %v131
    %v133 = vpop.f32.mrb[0].mxu0
    %v134 = vpop.f32.mrb[0].mxu0
    %v135 = vpop.f32.mrb[0].mxu0
    %136 = vdwg.mxu0
    %v137 = vmax.f32 %v132, 0.0
    %v138 = vpack.c.bf16 %v137, %v137
    %v145 = vunpack.c.l.b16 %v63
    %v146 = vunpack.c.l.b16 %v64
    %v147 = vunpack.c.l.b16 %v65
    %v148 = vunpack.c.l.b16 %v66
    %v149 = vunpack.c.l.b16 %v67
    %v150 = vunpack.c.l.b16 %v68
    %v151 = vpack.c.b16 %v146, %v145
    %v152 = vpack.c.b16 %v148, %v147
    %v153 = vpack.c.b16 %v150, %v149
    %vm157 = vcmask 392192
    %v159 = vsel %vm157, %v138, 0
    %161 = vmatprep.subr.bf16.mxu0 0
    %162 = vmatpush1.bf16.msra.mxu0 %v151
    %163 = vmatprep.subr.bf16.mxu0 0
    %164 = vmatpush1.bf16.msra.mxu0 %v152
    %165 = vmatprep.subr.bf16.mxu0 0
    %166 = vmatpush1.bf16.msra.mxu0 %v153
    %167 = vmatprep.subr.bf16.mxu0 0
    %168 = vmatpush1.bf16.msra.mxu0 0
    %169 = vmatprep.subr.bf16.mxu0 0
    %170 = vmatpush1.bf16.msra.mxu0 0
    %171 = vmatprep.subr.bf16.mxu0 0
    %172 = vmatpush1.bf16.msra.mxu0 0
    %173 = vmatprep.subr.bf16.mxu0 0
    %174 = vmatpush1.bf16.msra.mxu0 0
    %175 = vmatprep.subr.bf16.mxu0 0
    %176 = vmatpush1.bf16.msra.mxu0 0
    %177 = vmatprep.subr.bf16.mxu0 0
    %178 = vmatpush1.bf16.msra.mxu0 0
    %179 = vmatprep.subr.bf16.mxu0 0
    %180 = vmatpush1.bf16.msra.mxu0 0
    %181 = vmatprep.subr.bf16.mxu0 0
    %182 = vmatpush1.bf16.msra.mxu0 0
    %183 = vmatprep.subr.bf16.mxu0 0
    %184 = vmatpush1.bf16.msra.mxu0 0
    %185 = vmatprep.subr.bf16.mxu0 0
    %186 = vmatpush1.bf16.msra.mxu0 0
    %187 = vmatprep.subr.bf16.mxu0 0
    %188 = vmatpush1.bf16.msra.mxu0 0
    %189 = vmatprep.subr.bf16.mxu0 0
    %190 = vmatpush1.bf16.msra.mxu0 0
    %191 = vmatprep.subr.bf16.mxu0 0
    %192 = vmatpush1.bf16.msra.mxu0 0
    %193 = vmatprep.mubr.bf16.mxu0 0
    %194 = vmatmul.mubr.bf16.gmra.mrb[0].mxu0 %v159
    %v195 = vpop.f32.mrb[0].mxu0
    %v196 = vadd.f32 0.0, %v195
    %v197 = vpop.f32.mrb[0].mxu0
    %v198 = vpop.f32.mrb[0].mxu0
    %v199 = vpop.f32.mrb[0].mxu0
    %200 = vdwg.mxu0
    %v201 = vmul.f32 %v196, 1.442695
    %v202 = vpow.pop %v201
    %v203 = vrsqrt.pop %v202
    %v204 = vmul.f32 %v202, %v203
    %vm205 = vcmp.eq.f32.partialorder %v202, inf
    %v206 = vsel %vm205, %v202, %v204
    %vm207 = vcmp.eq.f32.partialorder %v202, 0.0
    %v208 = vand.u32 %v202, 2147483648
    %v209 = vsel %vm207, %v208, %v206
    %v210 = vmul.f32 %v209, %v53
    %212 = vrot.lane.b32.xlu0 %v196, 120
    %v213 = vpop.permute.xlu0 %212
    %v215 = vadd.f32 %v210, %v213
    %vm216 = vcmask 64512
    %v217 = vsel %vm216, %v215, 0.0
    %v218 = vpack.c.bf16 %v217, %v217
    %v221 = vunpack.c.l.b16 %v69
    %v222 = vunpack.c.l.b16 %v70
    %v223 = vpack.c.b16 %v222, %v221
    %vm225 = vcmask 130048
    %v227 = vsel %vm225, %v218, 0
    %229 = vmatprep.subr.bf16.mxu0 0
    %230 = vmatpush1.bf16.msra.mxu0 %v223
    %231 = vmatprep.subr.bf16.mxu0 0
    %232 = vmatpush1.bf16.msra.mxu0 0
    %233 = vmatprep.subr.bf16.mxu0 0
    %234 = vmatpush1.bf16.msra.mxu0 0
    %235 = vmatprep.subr.bf16.mxu0 0
    %236 = vmatpush1.bf16.msra.mxu0 0
    %237 = vmatprep.subr.bf16.mxu0 0
    %238 = vmatpush1.bf16.msra.mxu0 0
    %239 = vmatprep.subr.bf16.mxu0 0
    %240 = vmatpush1.bf16.msra.mxu0 0
    %241 = vmatprep.subr.bf16.mxu0 0
    %242 = vmatpush1.bf16.msra.mxu0 0
    %243 = vmatprep.subr.bf16.mxu0 0
    %244 = vmatpush1.bf16.msra.mxu0 0
    %245 = vmatprep.subr.bf16.mxu0 0
    %246 = vmatpush1.bf16.msra.mxu0 0
    %247 = vmatprep.subr.bf16.mxu0 0
    %248 = vmatpush1.bf16.msra.mxu0 0
    %249 = vmatprep.subr.bf16.mxu0 0
    %250 = vmatpush1.bf16.msra.mxu0 0
    %251 = vmatprep.subr.bf16.mxu0 0
    %252 = vmatpush1.bf16.msra.mxu0 0
    %253 = vmatprep.subr.bf16.mxu0 0
    %254 = vmatpush1.bf16.msra.mxu0 0
    %255 = vmatprep.subr.bf16.mxu0 0
    %256 = vmatpush1.bf16.msra.mxu0 0
    %257 = vmatprep.subr.bf16.mxu0 0
    %258 = vmatpush1.bf16.msra.mxu0 0
    %259 = vmatprep.subr.bf16.mxu0 0
    %260 = vmatpush1.bf16.msra.mxu0 0
    %261 = vmatprep.mubr.bf16.mxu0 0
    %262 = vmatmul.mubr.bf16.gmra.mrb[0].mxu0 %v227
    %v263 = vpop.f32.mrb[0].mxu0
    %v264 = vadd.f32 0.0, %v263
    %v265 = vpop.f32.mrb[0].mxu0
    %v266 = vpop.f32.mrb[0].mxu0
    %v267 = vpop.f32.mrb[0].mxu0
    %268 = vdwg.mxu0
    %270 = vrot.lane.b32.xlu0 %v132, 80
    %v271 = vpop.permute.xlu0 %270
    %v273 = vadd.f32 %v264, %v271
    %v274 = vmax.f32 %v273, 0.0
    %v275 = vpack.c.bf16 %v274, %v274
    %v286 = vunpack.c.l.b16 %v71
    %v287 = vunpack.c.l.b16 %v72
    %v288 = vunpack.c.l.b16 %v73
    %v289 = vunpack.c.l.b16 %v74
    %v290 = vunpack.c.l.b16 %v75
    %v291 = vunpack.c.l.b16 %v76
    %v292 = vunpack.c.l.b16 %v77
    %v293 = vunpack.c.l.b16 %v78
    %v294 = vunpack.c.l.b16 %v79
    %v295 = vunpack.c.l.b16 %v80
    %v296 = vpack.c.b16 %v287, %v286
    %v297 = vpack.c.b16 %v289, %v288
    %v298 = vpack.c.b16 %v291, %v290
    %v299 = vpack.c.b16 %v293, %v292
    %v300 = vpack.c.b16 %v295, %v294
    %vm306 = vcmask 654336
    %v308 = vsel %vm306, %v275, 0
    %310 = vmatprep.subr.bf16.mxu0 0
    %311 = vmatpush1.bf16.msra.mxu0 %v296
    %312 = vmatprep.subr.bf16.mxu0 0
    %313 = vmatpush1.bf16.msra.mxu0 %v297
    %314 = vmatprep.subr.bf16.mxu0 0
    %315 = vmatpush1.bf16.msra.mxu0 %v298
    %316 = vmatprep.subr.bf16.mxu0 0
    %317 = vmatpush1.bf16.msra.mxu0 %v299
    %318 = vmatprep.subr.bf16.mxu0 0
    %319 = vmatpush1.bf16.msra.mxu0 %v300
    %320 = vmatprep.subr.bf16.mxu0 0
    %321 = vmatpush1.bf16.msra.mxu0 0
    %322 = vmatprep.subr.bf16.mxu0 0
    %323 = vmatpush1.bf16.msra.mxu0 0
    %324 = vmatprep.subr.bf16.mxu0 0
    %325 = vmatpush1.bf16.msra.mxu0 0
    %326 = vmatprep.subr.bf16.mxu0 0
    %327 = vmatpush1.bf16.msra.mxu0 0
    %328 = vmatprep.subr.bf16.mxu0 0
    %329 = vmatpush1.bf16.msra.mxu0 0
    %330 = vmatprep.subr.bf16.mxu0 0
    %331 = vmatpush1.bf16.msra.mxu0 0
    %332 = vmatprep.subr.bf16.mxu0 0
    %333 = vmatpush1.bf16.msra.mxu0 0
    %334 = vmatprep.subr.bf16.mxu0 0
    %335 = vmatpush1.bf16.msra.mxu0 0
    %336 = vmatprep.subr.bf16.mxu0 0
    %337 = vmatpush1.bf16.msra.mxu0 0
    %338 = vmatprep.subr.bf16.mxu0 0
    %339 = vmatpush1.bf16.msra.mxu0 0
    %340 = vmatprep.subr.bf16.mxu0 0
    %341 = vmatpush1.bf16.msra.mxu0 0
    %342 = vmatprep.mubr.bf16.mxu0 0
    %343 = vmatmul.mubr.bf16.gmra.mrb[0].mxu0 %v308
    %v344 = vpop.f32.mrb[0].mxu0
    %v345 = vadd.f32 0.0, %v344
    %v346 = vpop.f32.mrb[0].mxu0
    %v347 = vpop.f32.mrb[0].mxu0
    %v348 = vpop.f32.mrb[0].mxu0
    %349 = vdwg.mxu0
    %v350 = vxor.u32 %v345, 2147483648
    %v351 = vmul.f32 %v350, 1.442695
    %v352 = vpow.pop %v351
    %v353 = vadd.f32 %v352, 1.0
    %v354 = vrcp.pop %v353
    %v355 = vmul.f32 1.0, %v354
    %v356 = vmax.f32 %v345, 0.0
    %v357 = vmul.f32 %v345, %v52
    %v358 = vsub.f32 %v356, %v357
    %v359 = vand.u32 2147483647, %v345
    %v360 = vsub.f32 0.0, %v359
    %v361 = vmul.f32 %v360, 1.442695
    %v362 = vpow.pop %v361
    %v363 = vadd.f32 %v362, 1.0
    %v364 = vlog2.pop %v363
    %v365 = vmul.f32 %v364, 0.6931472
    %v366 = vadd.f32 %v358, %v365
    %v367 = vsel %vm225, %v366, 0.0
    %368 = vadd.xlane.f32.xlu0 %v367
    %v369 = vpop.xlane.xlu0 %368
    %v370 = vrot.slane %v369, 4
    %v371 = vadd.f32 %v369, %v370
    %v372 = vrot.slane %v371, 2
    %v373 = vadd.f32 %v371, %v372
    %v374 = vrot.slane %v373, 1
    %v375 = vadd.f32 %v373, %v374
    %s376 = vtos %v375
    %v377 = vmin.f32 %v345, 0.0
    %v378 = vsub.f32 %v377, %v365
    %v379 = vmax.f32 %v378, -100.0
    %v380 = vsub.f32 %v378, %v345
    %v381 = vmax.f32 %v380, -100.0
    %383 = vrot.lane.b32.xlu0 %v379, 2
    %v384 = vpop.permute.xlu0 %383
    %v386 = vmul.f32 %v52, %v384
    %v387 = vsub.f32 1.0, %v52
    %389 = vrot.lane.b32.xlu0 %v381, 2
    %v390 = vpop.permute.xlu0 %389
    %v392 = vmul.f32 %v387, %v390
    %v393 = vadd.f32 %v386, %v392
    %v394 = vsub.f32 0.0, %v393
    %396 = vrot.lane.b32.xlu0 %v394, 110
    %v397 = vpop.permute.xlu0 %396
    %vm399 = vcmask 15360
    %v400 = vsel %vm399, %v397, 0.0
    %401 = vadd.xlane.f32.xlu0 %v400
    %v402 = vpop.xlane.xlu0 %401
    %v403 = vrot.slane %v402, 4
    %v404 = vadd.f32 %v402, %v403
    %v405 = vrot.slane %v404, 2
    %v406 = vadd.f32 %v404, %v405
    %v407 = vrot.slane %v406, 1
    %v408 = vadd.f32 %v406, %v407
    %s409 = vtos %v408
    %v410 = vrcp.pop 16.0
    %s411 = vtos %v410
    %s412 = smul.f32 %s409, %s411
    %v413 = vmul.f32 %v196, %v196
    %v414 = vsub.f32 0.0, %v196
    %v415 = vsub.f32 %v414, 1.0
    %v416 = vadd.f32 %v415, %v202
    %418 = vrot.lane.b32.xlu0 %v413, 120
    %v419 = vpop.permute.xlu0 %418
    %v421 = vadd.f32 %v416, %v419
    %v422 = vsel %vm216, %v421, 0.0
    %423 = vadd.xlane.f32.xlu0 %v422
    %v424 = vpop.xlane.xlu0 %423
    %v425 = vrot.slane %v424, 4
    %v426 = vadd.f32 %v424, %v425
    %v427 = vrot.slane %v426, 2
    %v428 = vadd.f32 %v426, %v427
    %v429 = vrot.slane %v428, 1
    %v430 = vadd.f32 %v428, %v429
    %s431 = vtos %v430
    %s432 = smul.f32 %s431, 0.5
    %s433 = sadd.f32 %s376, %s432
    %s434 = smul.f32 %s433, 0.1
    %v435 = vrcp.pop 8.0
    %s436 = vtos %v435
    %s437 = smul.f32 %s434, %s436
    %s438 = sadd.f32 %s437, %s412
    %v439 = vadd.f32 %v202, 1e-08
    %v440 = vrcp.pop %v439
    %v441 = vmul.f32 1.0, %v440
    %v442 = vlog2.pop %v439
    %v443 = vmul.f32 %v442, 0.6931472
    %445 = vrot.lane.b32.xlu0 %v441, 8
    %v446 = vpop.permute.xlu0 %445
    %v448 = vmul.f32 %v196, %v446
    %v449 = vadd.f32 %v439, %v419
    %451 = vrot.lane.b32.xlu0 %v443, 24
    %v452 = vpop.permute.xlu0 %451
    %v454 = vsel %vm216, %v449, %v196
    %v455 = vsel %vm225, %v454, 1.0
    %vm456 = vcmask 195584
    %v457 = vsel %vm456, %v455, %v452
    %v458 = vmul.f32 %v448, -2.0
    %v459 = vmul.f32 %v196, %v448
    %460 = vrot.lane.b32.xlu0 %v443, 8
    %v461 = vpop.permute.xlu0 %460
    %v463 = vsub.f32 %v459, %v461
    %465 = vrot.lane.b32.xlu0 %v463, 8
    %v466 = vpop.permute.xlu0 %465
    %v468 = vsel %vm216, %v441, %v458
    %v469 = vsel %vm225, %v468, %v466
    %v470 = vsel %vm456, %v469, 1.0
    %v472 = vsel %vm93, %v457, 0
    %v475 = vsel %vm93, %v470, 0
    %477 = vmatprep.subr.mxu0 0.0
    %478 = vmatpush1.xpose.msra.mxu0 %v475
    %479 = vmatprep.subr.mxu0 0.0
    %480 = vmatpush1.xpose.msra.mxu0 0.0
    %481 = vmatprep.subr.mxu0 0.0
    %482 = vmatpush1.xpose.msra.mxu0 0.0
    %483 = vmatprep.subr.mxu0 0.0
    %484 = vmatpush1.xpose.msra.mxu0 0.0
    %485 = vmatprep.subr.mxu0 0.0
    %486 = vmatpush1.xpose.msra.mxu0 0.0
    %487 = vmatprep.subr.mxu0 0.0
    %488 = vmatpush1.xpose.msra.mxu0 0.0
    %489 = vmatprep.subr.mxu0 0.0
    %490 = vmatpush1.xpose.msra.mxu0 0.0
    %491 = vmatprep.subr.mxu0 0.0
    %492 = vmatpush1.xpose.msra.mxu0 0.0
    %493 = vmatprep.subr.mxu0 0.0
    %494 = vmatpush1.xpose.msra.mxu0 0.0
    %495 = vmatprep.subr.mxu0 0.0
    %496 = vmatpush1.xpose.msra.mxu0 0.0
    %497 = vmatprep.subr.mxu0 0.0
    %498 = vmatpush1.xpose.msra.mxu0 0.0
    %499 = vmatprep.subr.mxu0 0.0
    %500 = vmatpush1.xpose.msra.mxu0 0.0
    %501 = vmatprep.subr.mxu0 0.0
    %502 = vmatpush1.xpose.msra.mxu0 0.0
    %503 = vmatprep.subr.mxu0 0.0
    %504 = vmatpush1.xpose.msra.mxu0 0.0
    %505 = vmatprep.subr.mxu0 0.0
    %506 = vmatpush1.xpose.msra.mxu0 0.0
    %507 = vmatprep.subr.mxu0 0.0
    %508 = vmatpush1.xpose.msra.mxu0 0.0
    %509 = vmatprep.subr.mxu0 0.0
    %510 = vmatpush1.xpose.msra.mxu0 0.0
    %511 = vmatprep.subr.mxu0 0.0
    %512 = vmatpush1.xpose.msra.mxu0 0.0
    %513 = vmatprep.subr.mxu0 0.0
    %514 = vmatpush1.xpose.msra.mxu0 0.0
    %515 = vmatprep.subr.mxu0 0.0
    %516 = vmatpush1.xpose.msra.mxu0 0.0
    %517 = vmatprep.subr.mxu0 0.0
    %518 = vmatpush1.xpose.msra.mxu0 0.0
    %519 = vmatprep.subr.mxu0 0.0
    %520 = vmatpush1.xpose.msra.mxu0 0.0
    %521 = vmatprep.subr.mxu0 0.0
    %522 = vmatpush1.xpose.msra.mxu0 0.0
    %523 = vmatprep.subr.mxu0 0.0
    %524 = vmatpush1.xpose.msra.mxu0 0.0
    %525 = vmatprep.subr.mxu0 0.0
    %526 = vmatpush1.xpose.msra.mxu0 0.0
    %527 = vmatprep.subr.mxu0 0.0
    %528 = vmatpush1.xpose.msra.mxu0 0.0
    %529 = vmatprep.subr.mxu0 0.0
    %530 = vmatpush1.xpose.msra.mxu0 0.0
    %531 = vmatprep.subr.mxu0 0.0
    %532 = vmatpush1.xpose.msra.mxu0 0.0
    %533 = vmatprep.subr.mxu0 0.0
    %534 = vmatpush1.xpose.msra.mxu0 0.0
    %535 = vmatprep.subr.mxu0 0.0
    %536 = vmatpush1.xpose.msra.mxu0 0.0
    %537 = vmatprep.subr.mxu0 0.0
    %538 = vmatpush1.xpose.msra.mxu0 0.0
    %539 = vmatprep.subr.mxu0 0.0
    %540 = vmatpush1.xpose.msra.mxu0 0.0
    %541 = vmatprep.mubr.f32.mxu0 0.0
    %542 = vmatmul.mubr.f32.gmra.mrb[0].mxu0 %v472
    %v543 = vpop.f32.mrb[0].mxu0
    %v544 = vadd.f32 0.0, %v543
    %v545 = vpop.f32.mrb[0].mxu0
    %546 = vdwg.mxu0
    %v547 = vmul.f32 %v544, 0.5
    %v548 = vsub.f32 %v547, 4.0
    %v549 = vsel %vm216, %v548, 0.0
    %550 = vadd.xlane.f32.xlu0 %v549
    %v551 = vpop.xlane.xlu0 %550
    %v552 = vrcp.pop 8.0
    %v553 = vmul.f32 %v551, %v552
    %v554 = vrcp.pop 8.0
    %s555 = vtos %v554
    %s556 = smul.f32 %s376, %s555
    %s557 = smul.f32 %s556, 0.1
    %v558 = vstv %s557
    %v559 = vadd.f32 %v553, %v558
    %vm560 = vcmask 7168
    %v561 = vsel %vm560, %v559, 0.0
    %562 = vadd.xlane.f32.xlu0 %v561
    %v563 = vpop.xlane.xlu0 %562
    %v564 = vrot.slane %v563, 4
    %v565 = vadd.f32 %v563, %v564
    %v566 = vrot.slane %v565, 2
    %v567 = vadd.f32 %v565, %v566
    %v568 = vrot.slane %v567, 1
    %v569 = vadd.f32 %v567, %v568
    %s570 = vtos %v569
    %v571 = vrcp.pop 8.0
    %s572 = vtos %v571
    %s573 = smul.f32 %s570, %s572
    %s574 = smul.f32 %s573, 0.0
    %s575 = sadd.f32 %s438, %s574
    %v576 = vstv %s575
    %578 = vrot.lane.b32.xlu0 %v355, 114
    %v579 = vpop.permute.xlu0 %578
    %v581 = vsel %vm560, %v576, %v559
    %v582 = vsel %vm399, %v581, %v579
    %vm583 = vcmask 31744
    %v584 = vsel %vm583, %v582, 0.0
    %585 = vst [vmem:[%s3] sm:$0xff] %v584
    // Predicated region
    $region26: #{icvae_forward.1} parent=1 // pred_check
      _
    $region27: #{icvae_forward.1} parent=1 // pred_check_branch
      %587 = sbr.rel (0) target = $region29
    $region28: #{icvae_forward.1} parent=1 // pred_region
      _
    $region29: #{icvae_forward.1} parent=1 // pred_fallthru
      _
    // Predicated region
    $region30: #{icvae_forward.1} parent=1 // pred_check
      _
    $region31: #{icvae_forward.1} parent=1 // pred_check_branch
      %589 = sbr.rel (0) target = $region33
    $region32: #{icvae_forward.1} parent=1 // pred_region
      _
    $region33: #{icvae_forward.1} parent=1 // pred_fallthru
      _
    %590 = vsyncpa [#allocation3], 1
    %591 = vsyncpa [#allocation5], 1

</llo_original>
